<compile_context>
chip_gen: v5e
topology: v5e:2x2
jax: 0.10.0
libtpu: 0.0.40
codegen_flags: <defaults>
</compile_context>

<pallas_src>
import functools
import math

import jax
import jax.numpy as jnp
from jax import lax
from jax.experimental import pallas as pl
from jax.experimental.pallas import tpu as pltpu


SUB_B = 256          # inner sub-block rows: fills the MXU, bounds live ranges
_TILE_B_MAX = 1024   # max rows per grid step (amortizes per-step overhead)


def _actor_kernel(x_ref, w1_ref, b1_ref, w2_ref, b2_ref, w3_ref, b3_ref, o_ref,
                  *, sub_b):
    """3-layer MLP + tanh over one (tile_b, in_dim) batch tile.

    The tile is processed in `sub_b`-row chunks inside a fori_loop so the f32
    h1/h2 intermediates do not grow with tile_b (no vreg spill at large tiles).
    Bias-add / ReLU stay f32 on the VPU (v5e has no bf16 VPU); tanh goes to the
    EUP slot, which has slack under the MXU/DMA.
    """
    n_sub = x_ref.shape[0] // sub_b

    def body(s, carry):
        r0 = pl.multiple_of(s * sub_b, sub_b)
        xb = x_ref[pl.ds(r0, sub_b), :]
        # Layer 1: Linear + ReLU (bf16/f32 operands, f32 MXU accumulation).
        h1 = jnp.dot(xb, w1_ref[...], preferred_element_type=jnp.float32)
        h1 = jnp.maximum(h1 + b1_ref[...], 0.0)
        # Layer 2: Linear + ReLU.
        h2 = jnp.dot(h1.astype(w2_ref.dtype), w2_ref[...],
                     preferred_element_type=jnp.float32)
        h2 = jnp.maximum(h2 + b2_ref[...], 0.0)
        # Layer 3: Linear + tanh.
        h3 = jnp.dot(h2.astype(w3_ref.dtype), w3_ref[...],
                     preferred_element_type=jnp.float32)
        o_ref[pl.ds(r0, sub_b), :] = jnp.tanh(h3 + b3_ref[...]).astype(o_ref.dtype)
        return carry

    lax.fori_loop(0, n_sub, body, 0, unroll=True)   # static, short trip count


def prepare_params(params, *, compute_dtype=jnp.bfloat16):
    """One-time packing: cast matmul operands, lane-pad layer 3 to 128 lanes.

    Do this ONCE per weight update (RL rollout loop), not per forward call.
    Biases stay f32 (added post-accumulation on the VPU).
    Returns (packed_params, out_dim).
    """
    w1, b1, w2, b2, w3, b3 = params
    hidden, out_dim = w3.shape
    out_pad = pl.cdiv(out_dim, 128) * 128           # lane-dense output width
    w3p = jnp.zeros((hidden, out_pad), dtype=w3.dtype).at[:, :out_dim].set(w3)
    b3p = jnp.zeros((1, out_pad), dtype=b3.dtype).at[:, :out_dim].set(b3)
    packed = (
        w1.astype(compute_dtype), b1.astype(jnp.float32),
        w2.astype(compute_dtype), b2.astype(jnp.float32),
        w3p.astype(compute_dtype), b3p.astype(jnp.float32),
    )
    return packed, int(out_dim)


def choose_tile_b(batch, tile_b_max=_TILE_B_MAX):
    """Rows per grid step: multiple of SUB_B, capped at tile_b_max."""
    return int(min(pl.cdiv(batch, SUB_B) * SUB_B, tile_b_max))


def prepare_inputs(x, packed, *, tile_b_max=_TILE_B_MAX):
    """Cast x to the compute dtype and zero-pad batch to a tile_b multiple.

    Call this ONCE per rollout batch, then feed the result to `actor_apply`
    (no per-call XLA pad/cast/slice ops around the kernel).
    """
    w1 = packed[0]
    B = x.shape[0]
    tile_b = choose_tile_b(B, tile_b_max)
    b_pad = pl.cdiv(B, tile_b) * tile_b
    xp = x.astype(w1.dtype)
    if b_pad != B:
        xp = jnp.pad(xp, ((0, b_pad - B), (0, 0)))
    return xp, tile_b


@functools.partial(jax.jit, static_argnames=("tile_b",))
def actor_apply(x_padded, packed, *, tile_b):
    """Raw kernel call: x_padded pre-cast to compute dtype, batch % tile_b == 0.

    Returns the (b_pad, out_pad) lane-dense output in the compute dtype.
    Zero-padded batch rows / output lanes are mathematically inert (tanh(0+0)=0).
    """
    w1, b1, w2, b2, w3p, b3p = packed
    b_pad, in_dim = x_padded.shape
    hidden = w1.shape[1]
    out_pad = w3p.shape[1]
    if b_pad % tile_b:
        raise ValueError(f"batch {b_pad} must be a multiple of tile_b {tile_b}")
    out_dtype = w1.dtype

    itemsize = lambda a: a.size * a.dtype.itemsize
    cost = pl.CostEstimate(
        flops=2 * b_pad * (in_dim * hidden + hidden * hidden + hidden * out_pad),
        transcendentals=b_pad * out_pad,   # tanh
        bytes_accessed=(itemsize(x_padded)
                        + sum(itemsize(p) for p in packed)
                        + b_pad * out_pad * jnp.dtype(out_dtype).itemsize),
    )

    const = lambda i: (0, 0)   # weights/biases: same block every step (VMEM-resident)
    return pl.pallas_call(
        functools.partial(_actor_kernel, sub_b=SUB_B),
        out_shape=jax.ShapeDtypeStruct((b_pad, out_pad), out_dtype),
        grid_spec=pltpu.PrefetchScalarGridSpec(
            num_scalar_prefetch=0,
            grid=(b_pad // tile_b,),
            in_specs=[
                pl.BlockSpec((tile_b, in_dim), lambda i: (i, 0)),   # streamed x
                pl.BlockSpec((in_dim, hidden), const),
                pl.BlockSpec((1, hidden), const),
                pl.BlockSpec((hidden, hidden), const),
                pl.BlockSpec((1, hidden), const),
                pl.BlockSpec((hidden, out_pad), const),
                pl.BlockSpec((1, out_pad), const),
            ],
            out_specs=pl.BlockSpec((tile_b, out_pad), lambda i: (i, 0)),
        ),
        compiler_params=pltpu.CompilerParams(
            dimension_semantics=("parallel",),
        ),
        cost_estimate=cost,
    )(x_padded, w1, b1, w2, b2, w3p, b3p)


@functools.partial(jax.jit, static_argnames=("out_dim", "tile_b_max"))
def actor_forward(x, packed, *, out_dim, tile_b_max=_TILE_B_MAX):
    """Convenience wrapper with exact PyTorch forward() semantics (pad/cast/slice).

    For hot RL rollout loops prefer `prepare_inputs` + `actor_apply` to avoid the
    extra XLA ops around the kernel.
    """
    xp, tile_b = prepare_inputs(x, packed, tile_b_max=tile_b_max)
    out = actor_apply(xp, packed, tile_b=tile_b)
    return out[: x.shape[0], :out_dim]


def init_params(key, in_dim, hidden_dim, out_dim):
    """Deterministic init matching the module: xavier_uniform_(gain=relu), bias=0.01."""
    gain = math.sqrt(2.0)  # nn.init.calculate_gain('relu')

    def xavier(k, fan_in, fan_out):
        bound = gain * math.sqrt(6.0 / (fan_in + fan_out))
        return jax.random.uniform(
            k, (fan_in, fan_out), dtype=jnp.float32, minval=-bound, maxval=bound
        )

    k1, k2, k3 = jax.random.split(key, 3)
    w1 = xavier(k1, in_dim, hidden_dim)
    b1 = jnp.full((1, hidden_dim), 0.01, dtype=jnp.float32)
    w2 = xavier(k2, hidden_dim, hidden_dim)
    b2 = jnp.full((1, hidden_dim), 0.01, dtype=jnp.float32)
    w3 = xavier(k3, hidden_dim, out_dim)
    b3 = jnp.full((1, out_dim), 0.01, dtype=jnp.float32)
    return (w1, b1, w2, b2, w3, b3)


def reference_forward(x, params):
    """Plain-JAX f32 reference for correctness check."""
    w1, b1, w2, b2, w3, b3 = params
    h = jnp.maximum(x @ w1 + b1, 0.0)
    h = jnp.maximum(h @ w2 + b2, 0.0)
    return jnp.tanh(h @ w3 + b3)


if __name__ == "__main__":
    key = jax.random.PRNGKey(0)
    kx, kp = jax.random.split(key)

    batch = 2        # SMALL demo shape; real rollouts should batch >= 256 per call
    in_dim = 8       # observation dim
    hidden_dim = 128
    out_dim = 4      # action dim
    # action_bound is not used by forward(); kept for interface parity only.

    x = jax.random.normal(kx, (batch, in_dim), dtype=jnp.float32)
    params = init_params(kp, in_dim, hidden_dim, out_dim)
    ref = reference_forward(x, params)

    # Default bf16 operand path (MXU-peak on v5e/v6e/v7x; f32 MXU accumulation).
    # NOTE: x is cast to bf16 too — slight input quantization vs the f32 policy.
    packed_bf16, od = prepare_params(params)                 # compute_dtype=bf16
    out_bf16 = actor_forward(x, packed_bf16, out_dim=od)
    jax.block_until_ready(out_bf16)
    assert out_bf16.shape == (batch, out_dim)
    assert jnp.allclose(out_bf16.astype(jnp.float32), ref, atol=2.5e-2, rtol=2.5e-2)

    # f32 operand path (tight tolerance check).
    packed_f32, od = prepare_params(params, compute_dtype=jnp.float32)
    out_f32 = actor_forward(x, packed_f32, out_dim=od)
    jax.block_until_ready(out_f32)
    assert out_f32.shape == (batch, out_dim)
    assert jnp.allclose(out_f32, ref, atol=1e-5, rtol=1e-5)

    # Raw no-wrapper path (what a rollout loop should call).
    xp, tile_b = prepare_inputs(x, packed_bf16)
    out_raw = actor_apply(xp, packed_bf16, tile_b=tile_b)
    jax.block_until_ready(out_raw)
    assert jnp.allclose(out_raw[:batch, :od].astype(jnp.float32), ref,
                        atol=2.5e-2, rtol=2.5e-2)

    print("KERNEL_OK")
</pallas_src>

<mosaic_0001>
module attributes {stable_mosaic.version = 11 : i64} {
  func.func @_actor_kernel(%arg0: i32, %arg1: memref<256x8xbf16, #tpu.memory_space<vmem>>, %arg2: memref<8x128xbf16, #tpu.memory_space<vmem>>, %arg3: memref<1x128xf32, #tpu.memory_space<vmem>>, %arg4: memref<128x128xbf16, #tpu.memory_space<vmem>>, %arg5: memref<1x128xf32, #tpu.memory_space<vmem>>, %arg6: memref<128x128xbf16, #tpu.memory_space<vmem>>, %arg7: memref<1x128xf32, #tpu.memory_space<vmem>>, %arg8: memref<256x128xbf16, #tpu.memory_space<vmem>>) attributes {dimension_semantics = [#tpu.dimension_semantics<parallel>], iteration_bounds = array<i64: 1>, scalar_prefetch = 0 : i64, scratch_operands = 0 : i64, tpu.core_type = #tpu.core_type<tc>, window_params = [{transform_indices = @transform_0, window_bounds = array<i64: 256, 8>}, {pipeline_mode = #tpu.pipeline_mode<synchronous>, transform_indices = @transform_1, window_bounds = array<i64: 8, 128>}, {pipeline_mode = #tpu.pipeline_mode<synchronous>, transform_indices = @transform_2, window_bounds = array<i64: 1, 128>}, {pipeline_mode = #tpu.pipeline_mode<synchronous>, transform_indices = @transform_3, window_bounds = array<i64: 128, 128>}, {pipeline_mode = #tpu.pipeline_mode<synchronous>, transform_indices = @transform_4, window_bounds = array<i64: 1, 128>}, {pipeline_mode = #tpu.pipeline_mode<synchronous>, transform_indices = @transform_5, window_bounds = array<i64: 128, 128>}, {pipeline_mode = #tpu.pipeline_mode<synchronous>, transform_indices = @transform_6, window_bounds = array<i64: 1, 128>}, {transform_indices = @transform_7, window_bounds = array<i64: 256, 128>}]} {
    %c0_i32 = arith.constant 0 : i32
    %c256_i32 = arith.constant 256 : i32
    %0 = arith.muli %c0_i32, %c256_i32 : i32
    %1 = tpu.assume_multiple %0, 256 : i32
    %2 = arith.index_cast %1 : i32 to index
    %c0 = arith.constant 0 : index
    %3 = vector.load %arg1[%2, %c0] : memref<256x8xbf16, #tpu.memory_space<vmem>>, vector<256x8xbf16>
    %c0_0 = arith.constant 0 : index
    %c0_1 = arith.constant 0 : index
    %4 = vector.load %arg2[%c0_0, %c0_1] : memref<8x128xbf16, #tpu.memory_space<vmem>>, vector<8x128xbf16>
    %cst = arith.constant dense<0.000000e+00> : vector<256x128xf32>
    %5 = tpu.matmul %3, %4, %cst {dimension_numbers = #tpu.dot_dimension_numbers<[1], [0], [0], [1], [0, 0, 1, 1], [], []>} : vector<256x8xbf16>, vector<8x128xbf16>, vector<256x128xf32> -> vector<256x128xf32>
    %c0_2 = arith.constant 0 : index
    %c0_3 = arith.constant 0 : index
    %6 = vector.load %arg3[%c0_2, %c0_3] : memref<1x128xf32, #tpu.memory_space<vmem>>, vector<1x128xf32>
    %7 = vector.broadcast %6 : vector<1x128xf32> to vector<256x128xf32>
    %8 = arith.addf %5, %7 : vector<256x128xf32>
    %cst_4 = arith.constant 0.000000e+00 : f32
    %9 = vector.broadcast %cst_4 : f32 to vector<256x128xf32>
    %10 = arith.maximumf %8, %9 : vector<256x128xf32>
    %11 = arith.truncf %10 : vector<256x128xf32> to vector<256x128xbf16>
    %c0_5 = arith.constant 0 : index
    %c0_6 = arith.constant 0 : index
    %12 = vector.load %arg4[%c0_5, %c0_6] : memref<128x128xbf16, #tpu.memory_space<vmem>>, vector<128x128xbf16>
    %cst_7 = arith.constant dense<0.000000e+00> : vector<256x128xf32>
    %13 = tpu.matmul %11, %12, %cst_7 {dimension_numbers = #tpu.dot_dimension_numbers<[1], [0], [0], [1], [0, 0, 1, 1], [], []>} : vector<256x128xbf16>, vector<128x128xbf16>, vector<256x128xf32> -> vector<256x128xf32>
    %c0_8 = arith.constant 0 : index
    %c0_9 = arith.constant 0 : index
    %14 = vector.load %arg5[%c0_8, %c0_9] : memref<1x128xf32, #tpu.memory_space<vmem>>, vector<1x128xf32>
    %15 = vector.broadcast %14 : vector<1x128xf32> to vector<256x128xf32>
    %16 = arith.addf %13, %15 : vector<256x128xf32>
    %cst_10 = arith.constant 0.000000e+00 : f32
    %17 = vector.broadcast %cst_10 : f32 to vector<256x128xf32>
    %18 = arith.maximumf %16, %17 : vector<256x128xf32>
    %19 = arith.truncf %18 : vector<256x128xf32> to vector<256x128xbf16>
    %c0_11 = arith.constant 0 : index
    %c0_12 = arith.constant 0 : index
    %20 = vector.load %arg6[%c0_11, %c0_12] : memref<128x128xbf16, #tpu.memory_space<vmem>>, vector<128x128xbf16>
    %cst_13 = arith.constant dense<0.000000e+00> : vector<256x128xf32>
    %21 = tpu.matmul %19, %20, %cst_13 {dimension_numbers = #tpu.dot_dimension_numbers<[1], [0], [0], [1], [0, 0, 1, 1], [], []>} : vector<256x128xbf16>, vector<128x128xbf16>, vector<256x128xf32> -> vector<256x128xf32>
    %c0_14 = arith.constant 0 : index
    %c0_15 = arith.constant 0 : index
    %22 = vector.load %arg7[%c0_14, %c0_15] : memref<1x128xf32, #tpu.memory_space<vmem>>, vector<1x128xf32>
    %23 = vector.broadcast %22 : vector<1x128xf32> to vector<256x128xf32>
    %24 = arith.addf %21, %23 : vector<256x128xf32>
    %25 = math.tanh %24 : vector<256x128xf32>
    %26 = arith.truncf %25 : vector<256x128xf32> to vector<256x128xbf16>
    %27 = arith.index_cast %1 : i32 to index
    %c0_16 = arith.constant 0 : index
    %28 = vector.load %arg8[%27, %c0_16] : memref<256x128xbf16, #tpu.memory_space<vmem>>, vector<256x128xbf16>
    tpu.vector_store %arg8[%27, %c0_16], %26 {strides = array<i32>} : memref<256x128xbf16, #tpu.memory_space<vmem>>, vector<256x128xbf16>,
    %c1_i32 = arith.constant 1 : i32
    return
  }
  func.func @transform_0(%arg0: i32) -> (i32, i32) {
    %c0_i32 = arith.constant 0 : i32
    %c0_i32_0 = arith.constant 0 : i32
    return %arg0, %c0_i32 : i32, i32
  }
  func.func @transform_1(%arg0: i32) -> (i32, i32) {
    %c0_i32 = arith.constant 0 : i32
    %c0_i32_0 = arith.constant 0 : i32
    %c0_i32_1 = arith.constant 0 : i32
    return %c0_i32, %c0_i32_0 : i32, i32
  }
  func.func @transform_2(%arg0: i32) -> (i32, i32) {
    %c0_i32 = arith.constant 0 : i32
    %c0_i32_0 = arith.constant 0 : i32
    %c0_i32_1 = arith.constant 0 : i32
    return %c0_i32, %c0_i32_0 : i32, i32
  }
  func.func @transform_3(%arg0: i32) -> (i32, i32) {
    %c0_i32 = arith.constant 0 : i32
    %c0_i32_0 = arith.constant 0 : i32
    %c0_i32_1 = arith.constant 0 : i32
    return %c0_i32, %c0_i32_0 : i32, i32
  }
  func.func @transform_4(%arg0: i32) -> (i32, i32) {
    %c0_i32 = arith.constant 0 : i32
    %c0_i32_0 = arith.constant 0 : i32
    %c0_i32_1 = arith.constant 0 : i32
    return %c0_i32, %c0_i32_0 : i32, i32
  }
  func.func @transform_5(%arg0: i32) -> (i32, i32) {
    %c0_i32 = arith.constant 0 : i32
    %c0_i32_0 = arith.constant 0 : i32
    %c0_i32_1 = arith.constant 0 : i32
    return %c0_i32, %c0_i32_0 : i32, i32
  }
  func.func @transform_6(%arg0: i32) -> (i32, i32) {
    %c0_i32 = arith.constant 0 : i32
    %c0_i32_0 = arith.constant 0 : i32
    %c0_i32_1 = arith.constant 0 : i32
    return %c0_i32, %c0_i32_0 : i32, i32
  }
  func.func @transform_7(%arg0: i32) -> (i32, i32) {
    %c0_i32 = arith.constant 0 : i32
    %c0_i32_0 = arith.constant 0 : i32
    return %arg0, %c0_i32 : i32, i32
  }
}

</mosaic_0001>

<llo_original>
// kernel: actor_apply.1
$region0: #{actor_apply.1}
  #allocation0 [shape = 'u32[]', space=smem, size = 0x4, offset = 0x4, fixed_abs, tag = 'smem constant byte address 0x4 - core index']
  #allocation1 [shape = 'u32[72,128]{1,0:T(1,128)}', space=vmem, size = 0x9000, scoped, tag = 'internal scratch']
  %s0 = inlined_call_operand.vmem [shape: bf16[256,8], index: 0, kind: input, shape index: {}]
  %s1 = inlined_call_operand.vmem [shape: bf16[8,128], index: 1, kind: input, shape index: {}]
  %s2 = inlined_call_operand.vmem [shape: f32[1,128], index: 2, kind: input, shape index: {}]
  %s3 = inlined_call_operand.vmem [shape: bf16[128,128], index: 3, kind: input, shape index: {}]
  %s4 = inlined_call_operand.vmem [shape: f32[1,128], index: 4, kind: input, shape index: {}]
  %s5 = inlined_call_operand.vmem [shape: bf16[128,128], index: 5, kind: input, shape index: {}]
  %s6 = inlined_call_operand.vmem [shape: f32[1,128], index: 6, kind: input, shape index: {}]
  %s7 = inlined_call_operand.hbm [shape: bf16[256,128], index: 7, kind: output, shape index: {}]
  %s8 = sld [smem:[#allocation0]]
  $region38: #{actor_apply.1} parent=0
    _
  %s10 = ssub.s32 1, %s8
  %s11 = scalar_select 0, %s10, %s8
  $region1: #{actor_apply.1} parent=0
    #allocation2 [shape = 'u8[65536]{0}', space=vmem, size = 0x10000, scoped, tag = 'output window, operand 0, single buffered']
    #allocation3 [shape = 's32[1]{0}', space=sflag, size = 0x4, scoped, tag = 'scoped memory for actor_apply.1']
    %12 = vsyncpa [#allocation3], 0
    // Predicated region
    $region2: #{actor_apply.1} parent=1 // pred_check
      _
    $region3: #{actor_apply.1} parent=1 // pred_check_branch
      %14 = sbr.rel (0) target = $region5
    $region4: #{actor_apply.1} parent=1 // pred_region
      _
    $region5: #{actor_apply.1} parent=1 // pred_fallthru
      _
    // Predicated region
    $region6: #{actor_apply.1} parent=1 // pred_check
      _
    $region7: #{actor_apply.1} parent=1 // pred_check_branch
      %16 = sbr.rel (0) target = $region9
    $region8: #{actor_apply.1} parent=1 // pred_region
      _
    $region9: #{actor_apply.1} parent=1 // pred_fallthru
      _
    // Predicated region
    $region10: #{actor_apply.1} parent=1 // pred_check
      _
    $region11: #{actor_apply.1} parent=1 // pred_check_branch
      %18 = sbr.rel (0) target = $region13
    $region12: #{actor_apply.1} parent=1 // pred_region
      _
    $region13: #{actor_apply.1} parent=1 // pred_fallthru
      _
    // Predicated region
    $region14: #{actor_apply.1} parent=1 // pred_check
      _
    $region15: #{actor_apply.1} parent=1 // pred_check_branch
      %20 = sbr.rel (0) target = $region17
    $region16: #{actor_apply.1} parent=1 // pred_region
      _
    $region17: #{actor_apply.1} parent=1 // pred_fallthru
      _
    // Predicated region
    $region18: #{actor_apply.1} parent=1 // pred_check
      _
    $region19: #{actor_apply.1} parent=1 // pred_check_branch
      %22 = sbr.rel (0) target = $region21
    $region20: #{actor_apply.1} parent=1 // pred_region
      _
    $region21: #{actor_apply.1} parent=1 // pred_fallthru
      _
    // Predicated region
    $region22: #{actor_apply.1} parent=1 // pred_check
      _
    $region23: #{actor_apply.1} parent=1 // pred_check_branch
      %24 = sbr.rel (0) target = $region25
    $region24: #{actor_apply.1} parent=1 // pred_region
      _
    $region25: #{actor_apply.1} parent=1 // pred_fallthru
      _
    // Predicated region
    $region26: #{actor_apply.1} parent=1 // pred_check
      _
    $region27: #{actor_apply.1} parent=1 // pred_check_branch
      %26 = sbr.rel (0) target = $region29
    $region28: #{actor_apply.1} parent=1 // pred_region
      _
    $region29: #{actor_apply.1} parent=1 // pred_fallthru
      _
    %v28 = vld [vmem:[%s0] sm:$0xf]
    %v29 = vld [vmem:[%s0 + $0x4] sm:$0xf]
    %v30 = vld [vmem:[%s0 + $0x8] sm:$0xf]
    %v31 = vld [vmem:[%s0 + $0xc] sm:$0xf]
    %v32 = vld [vmem:[%s0 + $0x10] sm:$0xf]
    %v33 = vld [vmem:[%s0 + $0x14] sm:$0xf]
    %v34 = vld [vmem:[%s0 + $0x18] sm:$0xf]
    %v35 = vld [vmem:[%s0 + $0x1c] sm:$0xf]
    %v36 = vld [vmem:[%s0 + $0x20] sm:$0xf]
    %v37 = vld [vmem:[%s0 + $0x24] sm:$0xf]
    %v38 = vld [vmem:[%s0 + $0x28] sm:$0xf]
    %v39 = vld [vmem:[%s0 + $0x2c] sm:$0xf]
    %v40 = vld [vmem:[%s0 + $0x30] sm:$0xf]
    %v41 = vld [vmem:[%s0 + $0x34] sm:$0xf]
    %v42 = vld [vmem:[%s0 + $0x38] sm:$0xf]
    %v43 = vld [vmem:[%s0 + $0x3c] sm:$0xf]
    %v44 = vld [vmem:[%s0 + $0x40] sm:$0xf]
    %v45 = vld [vmem:[%s0 + $0x44] sm:$0xf]
    %v46 = vld [vmem:[%s0 + $0x48] sm:$0xf]
    %v47 = vld [vmem:[%s0 + $0x4c] sm:$0xf]
    %v48 = vld [vmem:[%s0 + $0x50] sm:$0xf]
    %v49 = vld [vmem:[%s0 + $0x54] sm:$0xf]
    %v50 = vld [vmem:[%s0 + $0x58] sm:$0xf]
    %v51 = vld [vmem:[%s0 + $0x5c] sm:$0xf]
    %v52 = vld [vmem:[%s0 + $0x60] sm:$0xf]
    %v53 = vld [vmem:[%s0 + $0x64] sm:$0xf]
    %v54 = vld [vmem:[%s0 + $0x68] sm:$0xf]
    %v55 = vld [vmem:[%s0 + $0x6c] sm:$0xf]
    %v56 = vld [vmem:[%s0 + $0x70] sm:$0xf]
    %v57 = vld [vmem:[%s0 + $0x74] sm:$0xf]
    %v58 = vld [vmem:[%s0 + $0x78] sm:$0xf]
    %v59 = vld [vmem:[%s0 + $0x7c] sm:$0xf]
    %v60 = vld [vmem:[%s1] sm:$0xf]
    %v61 = vld [vmem:[%s2] sm:$0x1]
    %v63 = vperm.slane %v61, 0
    %v97 = vunpack.c.l.b16 %v28
    %v98 = vunpack.c.l.b16 %v29
    %v99 = vunpack.c.l.b16 %v30
    %v100 = vunpack.c.l.b16 %v31
    %v101 = vunpack.c.l.b16 %v32
    %v102 = vunpack.c.l.b16 %v33
    %v103 = vunpack.c.l.b16 %v34
    %v104 = vunpack.c.l.b16 %v35
    %v105 = vunpack.c.l.b16 %v36
    %v106 = vunpack.c.l.b16 %v37
    %v107 = vunpack.c.l.b16 %v38
    %v108 = vunpack.c.l.b16 %v39
    %v109 = vunpack.c.l.b16 %v40
    %v110 = vunpack.c.l.b16 %v41
    %v111 = vunpack.c.l.b16 %v42
    %v112 = vunpack.c.l.b16 %v43
    %v113 = vunpack.c.l.b16 %v44
    %v114 = vunpack.c.l.b16 %v45
    %v115 = vunpack.c.l.b16 %v46
    %v116 = vunpack.c.l.b16 %v47
    %v117 = vunpack.c.l.b16 %v48
    %v118 = vunpack.c.l.b16 %v49
    %v119 = vunpack.c.l.b16 %v50
    %v120 = vunpack.c.l.b16 %v51
    %v121 = vunpack.c.l.b16 %v52
    %v122 = vunpack.c.l.b16 %v53
    %v123 = vunpack.c.l.b16 %v54
    %v124 = vunpack.c.l.b16 %v55
    %v125 = vunpack.c.l.b16 %v56
    %v126 = vunpack.c.l.b16 %v57
    %v127 = vunpack.c.l.b16 %v58
    %v128 = vunpack.c.l.b16 %v59
    %v129 = vpack.c.b16 %v98, %v97
    %v130 = vpack.c.b16 %v100, %v99
    %v131 = vpack.c.b16 %v102, %v101
    %v132 = vpack.c.b16 %v104, %v103
    %v133 = vpack.c.b16 %v106, %v105
    %v134 = vpack.c.b16 %v108, %v107
    %v135 = vpack.c.b16 %v110, %v109
    %v136 = vpack.c.b16 %v112, %v111
    %v137 = vpack.c.b16 %v114, %v113
    %v138 = vpack.c.b16 %v116, %v115
    %v139 = vpack.c.b16 %v118, %v117
    %v140 = vpack.c.b16 %v120, %v119
    %v141 = vpack.c.b16 %v122, %v121
    %v142 = vpack.c.b16 %v124, %v123
    %v143 = vpack.c.b16 %v126, %v125
    %v144 = vpack.c.b16 %v128, %v127
    %vm145 = vcmask 64512
    %v147 = vsel %vm145, %v129, 0
    %v150 = vsel %vm145, %v130, 0
    %v153 = vsel %vm145, %v131, 0
    %v156 = vsel %vm145, %v132, 0
    %v159 = vsel %vm145, %v133, 0
    %v162 = vsel %vm145, %v134, 0
    %v165 = vsel %vm145, %v135, 0
    %v168 = vsel %vm145, %v136, 0
    %v171 = vsel %vm145, %v137, 0
    %v174 = vsel %vm145, %v138, 0
    %v177 = vsel %vm145, %v139, 0
    %v180 = vsel %vm145, %v140, 0
    %v183 = vsel %vm145, %v141, 0
    %v186 = vsel %vm145, %v142, 0
    %v189 = vsel %vm145, %v143, 0
    %v192 = vsel %vm145, %v144, 0
    %vm194 = vcmask 1043456
    %v196 = vsel %vm194, %v60, 0
    %198 = vmatpush.bf16.msra.mxu0 0
    %199 = vmatpush.bf16.msra.mxu0 0
    %200 = vmatpush.bf16.msra.mxu0 0
    %201 = vmatpush.bf16.msra.mxu0 0
    %202 = vmatpush.bf16.msra.mxu0 0
    %203 = vmatpush.bf16.msra.mxu0 0
    %204 = vmatpush.bf16.msra.mxu0 0
    %205 = vmatpush.bf16.msra.mxu0 %v196
    %206 = vmatmul.bf16.gmra.mxu0 %v147
    %v207 = vpop.f32.mrf.mxu0
    %v208 = vadd.f32 %v63, %v207
    %v209 = vpop.f32.mrf.mxu0
    %v210 = vadd.f32 %v63, %v209
    %211 = vmatmul.bf16.gmra.mxu0 %v150
    %v212 = vpop.f32.mrf.mxu0
    %v213 = vadd.f32 %v63, %v212
    %v214 = vpop.f32.mrf.mxu0
    %v215 = vadd.f32 %v63, %v214
    %216 = vmatmul.bf16.gmra.mxu0 %v153
    %v217 = vpop.f32.mrf.mxu0
    %v218 = vadd.f32 %v63, %v217
    %v219 = vpop.f32.mrf.mxu0
    %v220 = vadd.f32 %v63, %v219
    %221 = vmatmul.bf16.gmra.mxu0 %v156
    %v222 = vpop.f32.mrf.mxu0
    %v223 = vadd.f32 %v63, %v222
    %v224 = vpop.f32.mrf.mxu0
    %v225 = vadd.f32 %v63, %v224
    %226 = vmatmul.bf16.gmra.mxu0 %v159
    %v227 = vpop.f32.mrf.mxu0
    %v228 = vadd.f32 %v63, %v227
    %v229 = vpop.f32.mrf.mxu0
    %v230 = vadd.f32 %v63, %v229
    %231 = vmatmul.bf16.gmra.mxu0 %v162
    %v232 = vpop.f32.mrf.mxu0
    %v233 = vadd.f32 %v63, %v232
    %v234 = vpop.f32.mrf.mxu0
    %v235 = vadd.f32 %v63, %v234
    %236 = vmatmul.bf16.gmra.mxu0 %v165
    %v237 = vpop.f32.mrf.mxu0
    %v238 = vadd.f32 %v63, %v237
    %v239 = vpop.f32.mrf.mxu0
    %v240 = vadd.f32 %v63, %v239
    %241 = vmatmul.bf16.gmra.mxu0 %v168
    %v242 = vpop.f32.mrf.mxu0
    %v243 = vadd.f32 %v63, %v242
    %v244 = vpop.f32.mrf.mxu0
    %v245 = vadd.f32 %v63, %v244
    %246 = vmatmul.bf16.gmra.mxu0 %v171
    %v247 = vpop.f32.mrf.mxu0
    %v248 = vadd.f32 %v63, %v247
    %v249 = vpop.f32.mrf.mxu0
    %v250 = vadd.f32 %v63, %v249
    %251 = vmatmul.bf16.gmra.mxu0 %v174
    %v252 = vpop.f32.mrf.mxu0
    %v253 = vadd.f32 %v63, %v252
    %v254 = vpop.f32.mrf.mxu0
    %v255 = vadd.f32 %v63, %v254
    %256 = vmatmul.bf16.gmra.mxu0 %v177
    %v257 = vpop.f32.mrf.mxu0
    %v258 = vadd.f32 %v63, %v257
    %v259 = vpop.f32.mrf.mxu0
    %v260 = vadd.f32 %v63, %v259
    %261 = vmatmul.bf16.gmra.mxu0 %v180
    %v262 = vpop.f32.mrf.mxu0
    %v263 = vadd.f32 %v63, %v262
    %v264 = vpop.f32.mrf.mxu0
    %v265 = vadd.f32 %v63, %v264
    %266 = vmatmul.bf16.gmra.mxu0 %v183
    %v267 = vpop.f32.mrf.mxu0
    %v268 = vadd.f32 %v63, %v267
    %v269 = vpop.f32.mrf.mxu0
    %v270 = vadd.f32 %v63, %v269
    %271 = vmatmul.bf16.gmra.mxu0 %v186
    %v272 = vpop.f32.mrf.mxu0
    %v273 = vadd.f32 %v63, %v272
    %v274 = vpop.f32.mrf.mxu0
    %v275 = vadd.f32 %v63, %v274
    %276 = vmatmul.bf16.gmra.mxu0 %v189
    %v277 = vpop.f32.mrf.mxu0
    %v278 = vadd.f32 %v63, %v277
    %v279 = vpop.f32.mrf.mxu0
    %v280 = vadd.f32 %v63, %v279
    %281 = vmatmul.bf16.gmra.mxu0 %v192
    %v282 = vpop.f32.mrf.mxu0
    %v283 = vadd.f32 %v63, %v282
    %v284 = vpop.f32.mrf.mxu0
    %v285 = vadd.f32 %v63, %v284
    %286 = vdwg.mxu0
    %v287 = vmax.f32 %v208, 0.0
    %v288 = vmax.f32 %v210, 0.0
    %v289 = vmax.f32 %v213, 0.0
    %v290 = vmax.f32 %v215, 0.0
    %v291 = vmax.f32 %v218, 0.0
    %v292 = vmax.f32 %v220, 0.0
    %v293 = vmax.f32 %v223, 0.0
    %v294 = vmax.f32 %v225, 0.0
    %v295 = vmax.f32 %v228, 0.0
    %v296 = vmax.f32 %v230, 0.0
    %v297 = vmax.f32 %v233, 0.0
    %v298 = vmax.f32 %v235, 0.0
    %v299 = vmax.f32 %v238, 0.0
    %v300 = vmax.f32 %v240, 0.0
    %v301 = vmax.f32 %v243, 0.0
    %v302 = vmax.f32 %v245, 0.0
    %v303 = vmax.f32 %v248, 0.0
    %v304 = vmax.f32 %v250, 0.0
    %v305 = vmax.f32 %v253, 0.0
    %v306 = vmax.f32 %v255, 0.0
    %v307 = vmax.f32 %v258, 0.0
    %v308 = vmax.f32 %v260, 0.0
    %v309 = vmax.f32 %v263, 0.0
    %v310 = vmax.f32 %v265, 0.0
    %v311 = vmax.f32 %v268, 0.0
    %v312 = vmax.f32 %v270, 0.0
    %v313 = vmax.f32 %v273, 0.0
    %v314 = vmax.f32 %v275, 0.0
    %v315 = vmax.f32 %v278, 0.0
    %v316 = vmax.f32 %v280, 0.0
    %v317 = vmax.f32 %v283, 0.0
    %v318 = vmax.f32 %v285, 0.0
    %v319 = vpack.c.bf16 %v288, %v287
    %v320 = vpack.c.bf16 %v290, %v289
    %v321 = vpack.c.bf16 %v292, %v291
    %v322 = vpack.c.bf16 %v294, %v293
    %v323 = vpack.c.bf16 %v296, %v295
    %v324 = vpack.c.bf16 %v298, %v297
    %v325 = vpack.c.bf16 %v300, %v299
    %v326 = vpack.c.bf16 %v302, %v301
    %v327 = vpack.c.bf16 %v304, %v303
    %v328 = vpack.c.bf16 %v306, %v305
    %v329 = vpack.c.bf16 %v308, %v307
    %v330 = vpack.c.bf16 %v310, %v309
    %v331 = vpack.c.bf16 %v312, %v311
    %v332 = vpack.c.bf16 %v314, %v313
    %v333 = vpack.c.bf16 %v316, %v315
    %v334 = vpack.c.bf16 %v318, %v317
    %v335 = vld [vmem:[%s3] sm:$0xf]
    %v336 = vld [vmem:[%s3 + $0x4] sm:$0xf]
    %v337 = vld [vmem:[%s3 + $0x8] sm:$0xf]
    %v338 = vld [vmem:[%s3 + $0xc] sm:$0xf]
    %v339 = vld [vmem:[%s3 + $0x10] sm:$0xf]
    %v340 = vld [vmem:[%s3 + $0x14] sm:$0xf]
    %v341 = vld [vmem:[%s3 + $0x18] sm:$0xf]
    %v342 = vld [vmem:[%s3 + $0x1c] sm:$0xf]
    %v343 = vld [vmem:[%s3 + $0x20] sm:$0xf]
    %v344 = vld [vmem:[%s3 + $0x24] sm:$0xf]
    %v345 = vld [vmem:[%s3 + $0x28] sm:$0xf]
    %v346 = vld [vmem:[%s3 + $0x2c] sm:$0xf]
    %v347 = vld [vmem:[%s3 + $0x30] sm:$0xf]
    %v348 = vld [vmem:[%s3 + $0x34] sm:$0xf]
    %v349 = vld [vmem:[%s3 + $0x38] sm:$0xf]
    %v350 = vld [vmem:[%s3 + $0x3c] sm:$0xf]
    %v351 = vld [vmem:[%s4] sm:$0x1]
    %v353 = vperm.slane %v351, 0
    %v371 = vunpack.c.l.b16 %v335
    %v372 = vunpack.c.l.b16 %v336
    %v373 = vunpack.c.l.b16 %v337
    %v374 = vunpack.c.l.b16 %v338
    %v375 = vunpack.c.l.b16 %v339
    %v376 = vunpack.c.l.b16 %v340
    %v377 = vunpack.c.l.b16 %v341
    %v378 = vunpack.c.l.b16 %v342
    %v379 = vunpack.c.l.b16 %v343
    %v380 = vunpack.c.l.b16 %v344
    %v381 = vunpack.c.l.b16 %v345
    %v382 = vunpack.c.l.b16 %v346
    %v383 = vunpack.c.l.b16 %v347
    %v384 = vunpack.c.l.b16 %v348
    %v385 = vunpack.c.l.b16 %v349
    %v386 = vunpack.c.l.b16 %v350
    %v387 = vpack.c.b16 %v372, %v371
    %v388 = vpack.c.b16 %v374, %v373
    %v389 = vpack.c.b16 %v376, %v375
    %v390 = vpack.c.b16 %v378, %v377
    %v391 = vpack.c.b16 %v380, %v379
    %v392 = vpack.c.b16 %v382, %v381
    %v393 = vpack.c.b16 %v384, %v383
    %v394 = vpack.c.b16 %v386, %v385
    %403 = vmatpush.bf16.msra.mxu0 %v394
    %404 = vmatpush.bf16.msra.mxu0 %v393
    %405 = vmatpush.bf16.msra.mxu0 %v392
    %406 = vmatpush.bf16.msra.mxu0 %v391
    %407 = vmatpush.bf16.msra.mxu0 %v390
    %408 = vmatpush.bf16.msra.mxu0 %v389
    %409 = vmatpush.bf16.msra.mxu0 %v388
    %410 = vmatpush.bf16.msra.mxu0 %v387
    %411 = vmatmul.bf16.gmra.mxu0 %v319
    %v412 = vpop.f32.mrf.mxu0
    %v413 = vadd.f32 %v353, %v412
    %v414 = vpop.f32.mrf.mxu0
    %v415 = vadd.f32 %v353, %v414
    %416 = vmatmul.bf16.gmra.mxu0 %v320
    %v417 = vpop.f32.mrf.mxu0
    %v418 = vadd.f32 %v353, %v417
    %v419 = vpop.f32.mrf.mxu0
    %v420 = vadd.f32 %v353, %v419
    %421 = vmatmul.bf16.gmra.mxu0 %v321
    %v422 = vpop.f32.mrf.mxu0
    %v423 = vadd.f32 %v353, %v422
    %v424 = vpop.f32.mrf.mxu0
    %v425 = vadd.f32 %v353, %v424
    %426 = vmatmul.bf16.gmra.mxu0 %v322
    %v427 = vpop.f32.mrf.mxu0
    %v428 = vadd.f32 %v353, %v427
    %v429 = vpop.f32.mrf.mxu0
    %v430 = vadd.f32 %v353, %v429
    %431 = vmatmul.bf16.gmra.mxu0 %v323
    %v432 = vpop.f32.mrf.mxu0
    %v433 = vadd.f32 %v353, %v432
    %v434 = vpop.f32.mrf.mxu0
    %v435 = vadd.f32 %v353, %v434
    %436 = vmatmul.bf16.gmra.mxu0 %v324
    %v437 = vpop.f32.mrf.mxu0
    %v438 = vadd.f32 %v353, %v437
    %v439 = vpop.f32.mrf.mxu0
    %v440 = vadd.f32 %v353, %v439
    %441 = vmatmul.bf16.gmra.mxu0 %v325
    %v442 = vpop.f32.mrf.mxu0
    %v443 = vadd.f32 %v353, %v442
    %v444 = vpop.f32.mrf.mxu0
    %v445 = vadd.f32 %v353, %v444
    %446 = vmatmul.bf16.gmra.mxu0 %v326
    %v447 = vpop.f32.mrf.mxu0
    %v448 = vadd.f32 %v353, %v447
    %v449 = vpop.f32.mrf.mxu0
    %v450 = vadd.f32 %v353, %v449
    %451 = vmatmul.bf16.gmra.mxu0 %v327
    %v452 = vpop.f32.mrf.mxu0
    %v453 = vadd.f32 %v353, %v452
    %v454 = vpop.f32.mrf.mxu0
    %v455 = vadd.f32 %v353, %v454
    %456 = vmatmul.bf16.gmra.mxu0 %v328
    %v457 = vpop.f32.mrf.mxu0
    %v458 = vadd.f32 %v353, %v457
    %v459 = vpop.f32.mrf.mxu0
    %v460 = vadd.f32 %v353, %v459
    %461 = vmatmul.bf16.gmra.mxu0 %v329
    %v462 = vpop.f32.mrf.mxu0
    %v463 = vadd.f32 %v353, %v462
    %v464 = vpop.f32.mrf.mxu0
    %v465 = vadd.f32 %v353, %v464
    %466 = vmatmul.bf16.gmra.mxu0 %v330
    %v467 = vpop.f32.mrf.mxu0
    %v468 = vadd.f32 %v353, %v467
    %v469 = vpop.f32.mrf.mxu0
    %v470 = vadd.f32 %v353, %v469
    %471 = vmatmul.bf16.gmra.mxu0 %v331
    %v472 = vpop.f32.mrf.mxu0
    %v473 = vadd.f32 %v353, %v472
    %v474 = vpop.f32.mrf.mxu0
    %v475 = vadd.f32 %v353, %v474
    %476 = vmatmul.bf16.gmra.mxu0 %v332
    %v477 = vpop.f32.mrf.mxu0
    %v478 = vadd.f32 %v353, %v477
    %v479 = vpop.f32.mrf.mxu0
    %v480 = vadd.f32 %v353, %v479
    %481 = vmatmul.bf16.gmra.mxu0 %v333
    %v482 = vpop.f32.mrf.mxu0
    %v483 = vadd.f32 %v353, %v482
    %v484 = vpop.f32.mrf.mxu0
    %v485 = vadd.f32 %v353, %v484
    %486 = vmatmul.bf16.gmra.mxu0 %v334
    %v487 = vpop.f32.mrf.mxu0
    %v488 = vadd.f32 %v353, %v487
    %v489 = vpop.f32.mrf.mxu0
    %v490 = vadd.f32 %v353, %v489
    %491 = vdwg.mxu0
    %v492 = vmax.f32 %v413, 0.0
    %v493 = vmax.f32 %v415, 0.0
    %v494 = vmax.f32 %v418, 0.0
    %v495 = vmax.f32 %v420, 0.0
    %v496 = vmax.f32 %v423, 0.0
    %v497 = vmax.f32 %v425, 0.0
    %v498 = vmax.f32 %v428, 0.0
    %v499 = vmax.f32 %v430, 0.0
    %v500 = vmax.f32 %v433, 0.0
    %v501 = vmax.f32 %v435, 0.0
    %v502 = vmax.f32 %v438, 0.0
    %v503 = vmax.f32 %v440, 0.0
    %v504 = vmax.f32 %v443, 0.0
    %v505 = vmax.f32 %v445, 0.0
    %v506 = vmax.f32 %v448, 0.0
    %v507 = vmax.f32 %v450, 0.0
    %v508 = vmax.f32 %v453, 0.0
    %v509 = vmax.f32 %v455, 0.0
    %v510 = vmax.f32 %v458, 0.0
    %v511 = vmax.f32 %v460, 0.0
    %v512 = vmax.f32 %v463, 0.0
    %v513 = vmax.f32 %v465, 0.0
    %v514 = vmax.f32 %v468, 0.0
    %v515 = vmax.f32 %v470, 0.0
    %v516 = vmax.f32 %v473, 0.0
    %v517 = vmax.f32 %v475, 0.0
    %v518 = vmax.f32 %v478, 0.0
    %v519 = vmax.f32 %v480, 0.0
    %v520 = vmax.f32 %v483, 0.0
    %v521 = vmax.f32 %v485, 0.0
    %v522 = vmax.f32 %v488, 0.0
    %v523 = vmax.f32 %v490, 0.0
    %v524 = vpack.c.bf16 %v493, %v492
    %v525 = vpack.c.bf16 %v495, %v494
    %v526 = vpack.c.bf16 %v497, %v496
    %v527 = vpack.c.bf16 %v499, %v498
    %v528 = vpack.c.bf16 %v501, %v500
    %v529 = vpack.c.bf16 %v503, %v502
    %v530 = vpack.c.bf16 %v505, %v504
    %v531 = vpack.c.bf16 %v507, %v506
    %v532 = vpack.c.bf16 %v509, %v508
    %v533 = vpack.c.bf16 %v511, %v510
    %v534 = vpack.c.bf16 %v513, %v512
    %v535 = vpack.c.bf16 %v515, %v514
    %v536 = vpack.c.bf16 %v517, %v516
    %v537 = vpack.c.bf16 %v519, %v518
    %v538 = vpack.c.bf16 %v521, %v520
    %v539 = vpack.c.bf16 %v523, %v522
    %v540 = vld [vmem:[%s5] sm:$0xf]
    %v541 = vld [vmem:[%s5 + $0x4] sm:$0xf]
    %v542 = vld [vmem:[%s5 + $0x8] sm:$0xf]
    %v543 = vld [vmem:[%s5 + $0xc] sm:$0xf]
    %v544 = vld [vmem:[%s5 + $0x10] sm:$0xf]
    %v545 = vld [vmem:[%s5 + $0x14] sm:$0xf]
    %v546 = vld [vmem:[%s5 + $0x18] sm:$0xf]
    %v547 = vld [vmem:[%s5 + $0x1c] sm:$0xf]
    %v548 = vld [vmem:[%s5 + $0x20] sm:$0xf]
    %v549 = vld [vmem:[%s5 + $0x24] sm:$0xf]
    %v550 = vld [vmem:[%s5 + $0x28] sm:$0xf]
    %v551 = vld [vmem:[%s5 + $0x2c] sm:$0xf]
    %v552 = vld [vmem:[%s5 + $0x30] sm:$0xf]
    %v553 = vld [vmem:[%s5 + $0x34] sm:$0xf]
    %v554 = vld [vmem:[%s5 + $0x38] sm:$0xf]
    %v555 = vld [vmem:[%s5 + $0x3c] sm:$0xf]
    %v556 = vld [vmem:[%s6] sm:$0x1]
    %v558 = vperm.slane %v556, 0
    %v576 = vunpack.c.l.b16 %v540
    %v577 = vunpack.c.l.b16 %v541
    %v578 = vunpack.c.l.b16 %v542
    %v579 = vunpack.c.l.b16 %v543
    %v580 = vunpack.c.l.b16 %v544
    %v581 = vunpack.c.l.b16 %v545
    %v582 = vunpack.c.l.b16 %v546
    %v583 = vunpack.c.l.b16 %v547
    %v584 = vunpack.c.l.b16 %v548
    %v585 = vunpack.c.l.b16 %v549
    %v586 = vunpack.c.l.b16 %v550
    %v587 = vunpack.c.l.b16 %v551
    %v588 = vunpack.c.l.b16 %v552
    %v589 = vunpack.c.l.b16 %v553
    %v590 = vunpack.c.l.b16 %v554
    %v591 = vunpack.c.l.b16 %v555
    %v592 = vpack.c.b16 %v577, %v576
    %v593 = vpack.c.b16 %v579, %v578
    %v594 = vpack.c.b16 %v581, %v580
    %v595 = vpack.c.b16 %v583, %v582
    %v596 = vpack.c.b16 %v585, %v584
    %v597 = vpack.c.b16 %v587, %v586
    %v598 = vpack.c.b16 %v589, %v588
    %v599 = vpack.c.b16 %v591, %v590
    %608 = vmatpush.bf16.msra.mxu0 %v599
    %609 = vmatpush.bf16.msra.mxu0 %v598
    %610 = vmatpush.bf16.msra.mxu0 %v597
    %611 = vmatpush.bf16.msra.mxu0 %v596
    %612 = vmatpush.bf16.msra.mxu0 %v595
    %613 = vmatpush.bf16.msra.mxu0 %v594
    %614 = vmatpush.bf16.msra.mxu0 %v593
    %615 = vmatpush.bf16.msra.mxu0 %v592
    %616 = vmatmul.bf16.gmra.mxu0 %v524
    %v617 = vpop.f32.mrf.mxu0
    %v618 = vadd.f32 %v558, %v617
    %v619 = vpop.f32.mrf.mxu0
    %v620 = vadd.f32 %v558, %v619
    %621 = vmatmul.bf16.gmra.mxu0 %v525
    %v622 = vpop.f32.mrf.mxu0
    %v623 = vadd.f32 %v558, %v622
    %v624 = vpop.f32.mrf.mxu0
    %v625 = vadd.f32 %v558, %v624
    %626 = vmatmul.bf16.gmra.mxu0 %v526
    %v627 = vpop.f32.mrf.mxu0
    %v628 = vadd.f32 %v558, %v627
    %v629 = vpop.f32.mrf.mxu0
    %v630 = vadd.f32 %v558, %v629
    %631 = vmatmul.bf16.gmra.mxu0 %v527
    %v632 = vpop.f32.mrf.mxu0
    %v633 = vadd.f32 %v558, %v632
    %v634 = vpop.f32.mrf.mxu0
    %v635 = vadd.f32 %v558, %v634
    %636 = vmatmul.bf16.gmra.mxu0 %v528
    %v637 = vpop.f32.mrf.mxu0
    %v638 = vadd.f32 %v558, %v637
    %v639 = vpop.f32.mrf.mxu0
    %v640 = vadd.f32 %v558, %v639
    %641 = vmatmul.bf16.gmra.mxu0 %v529
    %v642 = vpop.f32.mrf.mxu0
    %v643 = vadd.f32 %v558, %v642
    %v644 = vpop.f32.mrf.mxu0
    %v645 = vadd.f32 %v558, %v644
    %646 = vmatmul.bf16.gmra.mxu0 %v530
    %v647 = vpop.f32.mrf.mxu0
    %v648 = vadd.f32 %v558, %v647
    %v649 = vpop.f32.mrf.mxu0
    %v650 = vadd.f32 %v558, %v649
    %651 = vmatmul.bf16.gmra.mxu0 %v531
    %v652 = vpop.f32.mrf.mxu0
    %v653 = vadd.f32 %v558, %v652
    %v654 = vpop.f32.mrf.mxu0
    %v655 = vadd.f32 %v558, %v654
    %656 = vmatmul.bf16.gmra.mxu0 %v532
    %v657 = vpop.f32.mrf.mxu0
    %v658 = vadd.f32 %v558, %v657
    %v659 = vpop.f32.mrf.mxu0
    %v660 = vadd.f32 %v558, %v659
    %661 = vmatmul.bf16.gmra.mxu0 %v533
    %v662 = vpop.f32.mrf.mxu0
    %v663 = vadd.f32 %v558, %v662
    %v664 = vpop.f32.mrf.mxu0
    %v665 = vadd.f32 %v558, %v664
    %666 = vmatmul.bf16.gmra.mxu0 %v534
    %v667 = vpop.f32.mrf.mxu0
    %v668 = vadd.f32 %v558, %v667
    %v669 = vpop.f32.mrf.mxu0
    %v670 = vadd.f32 %v558, %v669
    %671 = vmatmul.bf16.gmra.mxu0 %v535
    %v672 = vpop.f32.mrf.mxu0
    %v673 = vadd.f32 %v558, %v672
    %v674 = vpop.f32.mrf.mxu0
    %v675 = vadd.f32 %v558, %v674
    %676 = vmatmul.bf16.gmra.mxu0 %v536
    %v677 = vpop.f32.mrf.mxu0
    %v678 = vadd.f32 %v558, %v677
    %v679 = vpop.f32.mrf.mxu0
    %v680 = vadd.f32 %v558, %v679
    %681 = vmatmul.bf16.gmra.mxu0 %v537
    %v682 = vpop.f32.mrf.mxu0
    %v683 = vadd.f32 %v558, %v682
    %v684 = vpop.f32.mrf.mxu0
    %v685 = vadd.f32 %v558, %v684
    %686 = vmatmul.bf16.gmra.mxu0 %v538
    %v687 = vpop.f32.mrf.mxu0
    %v688 = vadd.f32 %v558, %v687
    %v689 = vpop.f32.mrf.mxu0
    %v690 = vadd.f32 %v558, %v689
    %691 = vmatmul.bf16.gmra.mxu0 %v539
    %v692 = vpop.f32.mrf.mxu0
    %v693 = vadd.f32 %v558, %v692
    %v694 = vpop.f32.mrf.mxu0
    %v695 = vadd.f32 %v558, %v694
    %696 = vdwg.mxu0
    %v697 = vtanh.pop %v618
    %v698 = vtanh.pop %v620
    %v699 = vtanh.pop %v623
    %v700 = vtanh.pop %v625
    %v701 = vtanh.pop %v628
    %v702 = vtanh.pop %v630
    %v703 = vtanh.pop %v633
    %v704 = vtanh.pop %v635
    %v705 = vtanh.pop %v638
    %v706 = vtanh.pop %v640
    %v707 = vtanh.pop %v643
    %v708 = vtanh.pop %v645
    %v709 = vtanh.pop %v648
    %v710 = vtanh.pop %v650
    %v711 = vtanh.pop %v653
    %v712 = vtanh.pop %v655
    %v713 = vtanh.pop %v658
    %v714 = vtanh.pop %v660
    %v715 = vtanh.pop %v663
    %v716 = vtanh.pop %v665
    %v717 = vtanh.pop %v668
    %v718 = vtanh.pop %v670
    %v719 = vtanh.pop %v673
    %v720 = vtanh.pop %v675
    %v721 = vtanh.pop %v678
    %v722 = vtanh.pop %v680
    %v723 = vtanh.pop %v683
    %v724 = vtanh.pop %v685
    %v725 = vtanh.pop %v688
    %v726 = vtanh.pop %v690
    %v727 = vtanh.pop %v693
    %v728 = vtanh.pop %v695
    %v729 = vpack.c.bf16 %v697, %v697
    %v730 = vpack.c.bf16 %v698, %v698
    %v731 = vpack.c.bf16 %v699, %v699
    %v732 = vpack.c.bf16 %v700, %v700
    %v733 = vpack.c.bf16 %v701, %v701
    %v734 = vpack.c.bf16 %v702, %v702
    %v735 = vpack.c.bf16 %v703, %v703
    %v736 = vpack.c.bf16 %v704, %v704
    %v737 = vpack.c.bf16 %v705, %v705
    %v738 = vpack.c.bf16 %v706, %v706
    %v739 = vpack.c.bf16 %v707, %v707
    %v740 = vpack.c.bf16 %v708, %v708
    %v741 = vpack.c.bf16 %v709, %v709
    %v742 = vpack.c.bf16 %v710, %v710
    %v743 = vpack.c.bf16 %v711, %v711
    %v744 = vpack.c.bf16 %v712, %v712
    %v745 = vpack.c.bf16 %v713, %v713
    %v746 = vpack.c.bf16 %v714, %v714
    %v747 = vpack.c.bf16 %v715, %v715
    %v748 = vpack.c.bf16 %v716, %v716
    %v749 = vpack.c.bf16 %v717, %v717
    %v750 = vpack.c.bf16 %v718, %v718
    %v751 = vpack.c.bf16 %v719, %v719
    %v752 = vpack.c.bf16 %v720, %v720
    %v753 = vpack.c.bf16 %v721, %v721
    %v754 = vpack.c.bf16 %v722, %v722
    %v755 = vpack.c.bf16 %v723, %v723
    %v756 = vpack.c.bf16 %v724, %v724
    %v757 = vpack.c.bf16 %v725, %v725
    %v758 = vpack.c.bf16 %v726, %v726
    %v759 = vpack.c.bf16 %v727, %v727
    %v760 = vpack.c.bf16 %v728, %v728
    %761 = vst [vmem:[#allocation2] sm:$0xf] %v729
    %762 = vst [vmem:[#allocation2 + $0x4] sm:$0xf] %v730
    %763 = vst [vmem:[#allocation2 + $0x8] sm:$0xf] %v731
    %764 = vst [vmem:[#allocation2 + $0xc] sm:$0xf] %v732
    %765 = vst [vmem:[#allocation2 + $0x10] sm:$0xf] %v733
    %766 = vst [vmem:[#allocation2 + $0x14] sm:$0xf] %v734
    %767 = vst [vmem:[#allocation2 + $0x18] sm:$0xf] %v735
    %768 = vst [vmem:[#allocation2 + $0x1c] sm:$0xf] %v736
    %769 = vst [vmem:[#allocation2 + $0x20] sm:$0xf] %v737
    %770 = vst [vmem:[#allocation2 + $0x24] sm:$0xf] %v738
    %771 = vst [vmem:[#allocation2 + $0x28] sm:$0xf] %v739
    %772 = vst [vmem:[#allocation2 + $0x2c] sm:$0xf] %v740
    %773 = vst [vmem:[#allocation2 + $0x30] sm:$0xf] %v741
    %774 = vst [vmem:[#allocation2 + $0x34] sm:$0xf] %v742
    %775 = vst [vmem:[#allocation2 + $0x38] sm:$0xf] %v743
    %776 = vst [vmem:[#allocation2 + $0x3c] sm:$0xf] %v744
    %777 = vst [vmem:[#allocation2 + $0x40] sm:$0xf] %v745
    %778 = vst [vmem:[#allocation2 + $0x44] sm:$0xf] %v746
    %779 = vst [vmem:[#allocation2 + $0x48] sm:$0xf] %v747
    %780 = vst [vmem:[#allocation2 + $0x4c] sm:$0xf] %v748
    %781 = vst [vmem:[#allocation2 + $0x50] sm:$0xf] %v749
    %782 = vst [vmem:[#allocation2 + $0x54] sm:$0xf] %v750
    %783 = vst [vmem:[#allocation2 + $0x58] sm:$0xf] %v751
    %784 = vst [vmem:[#allocation2 + $0x5c] sm:$0xf] %v752
    %785 = vst [vmem:[#allocation2 + $0x60] sm:$0xf] %v753
    %786 = vst [vmem:[#allocation2 + $0x64] sm:$0xf] %v754
    %787 = vst [vmem:[#allocation2 + $0x68] sm:$0xf] %v755
    %788 = vst [vmem:[#allocation2 + $0x6c] sm:$0xf] %v756
    %789 = vst [vmem:[#allocation2 + $0x70] sm:$0xf] %v757
    %790 = vst [vmem:[#allocation2 + $0x74] sm:$0xf] %v758
    %791 = vst [vmem:[#allocation2 + $0x78] sm:$0xf] %v759
    %792 = vst [vmem:[#allocation2 + $0x7c] sm:$0xf] %v760
    // Predicated region
    $region30: #{actor_apply.1} parent=1 // pred_check
      _
    $region31: #{actor_apply.1} parent=1 // pred_check_branch
      %794 = sbr.rel (0) target = $region33
    $region32: #{actor_apply.1} parent=1 // pred_region
      %796 = vsyncadd [#allocation3], 0
      %s797 = sshll.u32 [#allocation2], 4
      %s798 = int_to_ptr.vmem [resolvable:$true] %s797
      %s799 = sshll.u32 %s7, 4
      %s800 = int_to_ptr.hbm [resolvable:$true] %s799
      %805 = dma.vmem_to_hbm [thread:$0]  %s798, 2048, %s800, [#allocation3], 64, 64, 4
    $region33: #{actor_apply.1} parent=1 // pred_fallthru
      _
    // Predicated region
    $region34: #{actor_apply.1} parent=1 // pred_check
      _
    $region35: #{actor_apply.1} parent=1 // pred_check_branch
      %807 = sbr.rel (0) target = $region37
    $region36: #{actor_apply.1} parent=1 // pred_region
      %809 = dma.done [#allocation3], 2048
    $region37: #{actor_apply.1} parent=1 // pred_fallthru
      _
    %810 = vsyncpa [#allocation3], 1

</llo_original>
